<compile_context>
chip_gen: v5e
topology: v5e:2x2
jax: 0.10.0
libtpu: 0.0.40
codegen_flags: <defaults>
</compile_context>

<pallas_src>
import functools
import math

import jax
import jax.numpy as jnp
from jax import lax
from jax.experimental import pallas as pl
from jax.experimental.pallas import tpu as pltpu


# ----------------------------------------------------------------------------
# Fused MHA kernel: one invocation, all batches and heads inside
# ----------------------------------------------------------------------------
def _fused_mha_kernel(q_ref, k_ref, v_ref, wq_ref, wk_ref, wv_ref, wo_ref,
                      o_ref, *, num_heads):
    """Full MHA forward, entirely VMEM-resident.

    q_ref : (B, Sq, Dq)      wq_ref : (H, Dq, Dh)   (scale already folded in)
    k_ref : (B, Sk, Dk)      wk_ref : (H, Dk, Dh)
    v_ref : (B, Sk, Dv)      wv_ref : (H, Dv, Dh)
    o_ref : (B, Sq, NH)      wo_ref : (H, Dh, NH)
    """
    q_in = q_ref[...].astype(jnp.float32)   # (B, Sq, Dq)
    k_in = k_ref[...].astype(jnp.float32)   # (B, Sk, Dk)
    v_in = v_ref[...].astype(jnp.float32)   # (B, Sk, Dv)

    acc = jnp.zeros(o_ref.shape, dtype=jnp.float32)   # (B, Sq, NH)

    for h in range(num_heads):   # static unroll; wX_ref[h] is a free leading-axis index
        # Per-head projections: (B, S, Din) @ (Din, Dh) -> (B, S, Dh).  MXU.
        q_h = jnp.dot(q_in, wq_ref[h], preferred_element_type=jnp.float32)
        k_h = jnp.dot(k_in, wk_ref[h], preferred_element_type=jnp.float32)
        v_h = jnp.dot(v_in, wv_ref[h], preferred_element_type=jnp.float32)

        # scores = q_h @ k_h^T per batch: contract the LAST dims (no transpose).
        scores = jnp.einsum("bqd,bkd->bqk", q_h, k_h,
                            preferred_element_type=jnp.float32)   # (B, Sq, Sk)

        # Softmax over keys (dim=2 in the torch code), f32 throughout.
        m = jnp.max(scores, axis=-1, keepdims=True)
        p = jnp.exp(scores - m)
        denom = jnp.sum(p, axis=-1, keepdims=True)
        attn = p * pl.reciprocal(denom, approx=True)   # EUP vrcp, off the VPU chain
        # TODO(synk): dropout on the attention weights is the eval-mode identity here.

        out_h = jnp.einsum("bqk,bkd->bqd", attn, v_h,
                           preferred_element_type=jnp.float32)    # (B, Sq, Dh)

        # Fold head-concat + output projection:
        #   concat_h(out_h) @ W_oT == sum_h out_h @ W_oT[h*Dh:(h+1)*Dh, :]
        acc = acc + jnp.dot(out_h, wo_ref[h],
                            preferred_element_type=jnp.float32)   # (B, Sq, NH)

    o_ref[...] = acc.astype(o_ref.dtype)


# ----------------------------------------------------------------------------
# One-time parameter preparation (outside the forward path)
# ----------------------------------------------------------------------------
def prepare_params(torch_style_params, num_heads):
    """Torch-style (out, in) weights -> per-head slabs, scale folded into w_q."""
    wq = jnp.asarray(torch_style_params["w_q"])   # (NH, Dq)
    wk = jnp.asarray(torch_style_params["w_k"])   # (NH, Dk)
    wv = jnp.asarray(torch_style_params["w_v"])   # (NH, Dv)
    wo = jnp.asarray(torch_style_params["w_o"])   # (NH, NH)
    NH = wq.shape[0]
    Dh = NH // num_heads
    scale = 1.0 / math.sqrt(Dh)

    def split_in_proj(w):                      # (NH, Din) -> (H, Din, Dh)
        din = w.shape[1]
        wt = w.T                               # (Din, NH): column block h = head h
        return jnp.transpose(wt.reshape(din, num_heads, Dh), (1, 0, 2))

    return {
        "w_q": split_in_proj(wq) * scale,      # scale folded in, one-time
        "w_k": split_in_proj(wk),
        "w_v": split_in_proj(wv),
        "w_o": wo.T.reshape(num_heads, Dh, NH),   # (H, Dh, NH)
    }


# ----------------------------------------------------------------------------
# Wrapper
# ----------------------------------------------------------------------------
def multi_head_attention(queries, keys, values, prepared, num_heads):
    """queries: (B, Sq, Dq), keys: (B, Sk, Dk), values: (B, Sk, Dv) -> (B, Sq, NH)."""
    B, Sq, _ = queries.shape
    NH = prepared["w_o"].shape[-1]

    kernel = functools.partial(_fused_mha_kernel, num_heads=num_heads)

    # Single invocation (no grid): the whole problem fits in VMEM, so a grid
    # would only add per-step pipeline overhead.
    vmem = pl.BlockSpec(memory_space=pltpu.MemorySpace.VMEM)
    return pl.pallas_call(
        kernel,
        out_shape=jax.ShapeDtypeStruct((B, Sq, NH), queries.dtype),
        in_specs=[vmem] * 7,
        out_specs=vmem,
    )(queries, keys, values,
      prepared["w_q"], prepared["w_k"], prepared["w_v"], prepared["w_o"])


# ----------------------------------------------------------------------------
# Pure-JAX reference (torch-style (out, in) weights) for a sanity check
# ----------------------------------------------------------------------------
def _transpose_qkv(x, num_heads):
    B, S, NHid = x.shape
    Dh = NHid // num_heads
    x = x.reshape(B, S, num_heads, Dh)
    x = jnp.transpose(x, (0, 2, 1, 3))
    return x.reshape(B * num_heads, S, Dh)


def _transpose_output(x, num_heads):
    BH, Sq, Dh = x.shape
    B = BH // num_heads
    x = x.reshape(B, num_heads, Sq, Dh)
    x = jnp.transpose(x, (0, 2, 1, 3))
    return x.reshape(B, Sq, num_heads * Dh)


def _reference(queries, keys, values, params, num_heads):
    def lin(x, w):
        return jnp.einsum("bsi,oi->bso", x, w)

    q = _transpose_qkv(lin(queries, params["w_q"]), num_heads)
    k = _transpose_qkv(lin(keys, params["w_k"]), num_heads)
    v = _transpose_qkv(lin(values, params["w_v"]), num_heads)
    d = q.shape[-1]
    scores = jnp.einsum("bqd,bkd->bqk", q, k) / math.sqrt(d)
    attn = jax.nn.softmax(scores, axis=2)
    out = jnp.einsum("bqk,bkd->bqd", attn, v)
    return lin(_transpose_output(out, num_heads), params["w_o"])


# ----------------------------------------------------------------------------
# Main
# ----------------------------------------------------------------------------
if __name__ == "__main__":
    # Module hyper-params (small, consistent with the module's forward).
    key_size = 16
    query_size = 16
    value_size = 16
    num_hiddens = 32
    num_heads = 4
    B, Sq, Sk = 2, 8, 8

    root = jax.random.PRNGKey(0)
    k_in, k_wq, k_wk, k_wv, k_wo = jax.random.split(root, 5)
    kq, kk, kv = jax.random.split(k_in, 3)

    queries = jax.random.normal(kq, (B, Sq, query_size), dtype=jnp.float32)
    keys = jax.random.normal(kk, (B, Sk, key_size), dtype=jnp.float32)
    values = jax.random.normal(kv, (B, Sk, value_size), dtype=jnp.float32)

    def init_linear(k, out_f, in_f):
        # deterministic uniform init, bias=False (as in the module)
        bound = 1.0 / math.sqrt(in_f)
        return jax.random.uniform(
            k, (out_f, in_f), minval=-bound, maxval=bound, dtype=jnp.float32
        )

    # Torch-style (out_features, in_features) weights...
    params = {
        "w_q": init_linear(k_wq, num_hiddens, query_size),
        "w_k": init_linear(k_wk, num_hiddens, key_size),
        "w_v": init_linear(k_wv, num_hiddens, value_size),
        "w_o": init_linear(k_wo, num_hiddens, num_hiddens),
    }
    # ...turned into per-head slabs (with the 1/sqrt(Dh) scale folded into w_q)
    # exactly once, outside the forward path.
    prepared = prepare_params(params, num_heads)

    out = multi_head_attention(queries, keys, values, prepared, num_heads)
    out = jax.block_until_ready(out)

    ref = _reference(queries, keys, values, params, num_heads)
    assert out.shape == (B, Sq, num_hiddens)
    # Tolerance loosened (vs 1e-4) because the softmax denominator uses the
    # EUP approximate reciprocal (~1e-3 relative worst case).
    assert jnp.allclose(out, ref, atol=1e-2, rtol=1e-2), (
        float(jnp.max(jnp.abs(out - ref))))

    print("KERNEL_OK")
</pallas_src>

<mosaic_0001>
module attributes {stable_mosaic.version = 11 : i64} {
  func.func @_fused_mha_kernel(%arg0: memref<2x8x16xf32, #tpu.memory_space<vmem>>, %arg1: memref<2x8x16xf32, #tpu.memory_space<vmem>>, %arg2: memref<2x8x16xf32, #tpu.memory_space<vmem>>, %arg3: memref<4x16x8xf32, #tpu.memory_space<vmem>>, %arg4: memref<4x16x8xf32, #tpu.memory_space<vmem>>, %arg5: memref<4x16x8xf32, #tpu.memory_space<vmem>>, %arg6: memref<4x8x32xf32, #tpu.memory_space<vmem>>, %arg7: memref<2x8x32xf32, #tpu.memory_space<vmem>>) attributes {dimension_semantics = [], scalar_prefetch = 0 : i64, scratch_operands = 0 : i64, tpu.core_type = #tpu.core_type<tc>} {
    %c0 = arith.constant 0 : index
    %c0_0 = arith.constant 0 : index
    %c0_1 = arith.constant 0 : index
    %0 = vector.load %arg0[%c0, %c0_0, %c0_1] : memref<2x8x16xf32, #tpu.memory_space<vmem>>, vector<2x8x16xf32>
    %c0_2 = arith.constant 0 : index
    %c0_3 = arith.constant 0 : index
    %c0_4 = arith.constant 0 : index
    %1 = vector.load %arg1[%c0_2, %c0_3, %c0_4] : memref<2x8x16xf32, #tpu.memory_space<vmem>>, vector<2x8x16xf32>
    %c0_5 = arith.constant 0 : index
    %c0_6 = arith.constant 0 : index
    %c0_7 = arith.constant 0 : index
    %2 = vector.load %arg2[%c0_5, %c0_6, %c0_7] : memref<2x8x16xf32, #tpu.memory_space<vmem>>, vector<2x8x16xf32>
    %cst = arith.constant 0.000000e+00 : f32
    %3 = vector.broadcast %cst : f32 to vector<2x8x32xf32>
    %c0_8 = arith.constant 0 : index
    %c0_9 = arith.constant 0 : index
    %c0_10 = arith.constant 0 : index
    %4 = vector.load %arg3[%c0_8, %c0_9, %c0_10] : memref<4x16x8xf32, #tpu.memory_space<vmem>>, vector<1x16x8xf32>
    %5 = vector.shape_cast %4 : vector<1x16x8xf32> to vector<16x8xf32>
    %cst_11 = arith.constant dense<0.000000e+00> : vector<2x8x8xf32>
    %6 = tpu.matmul %0, %5, %cst_11 {dimension_numbers = #tpu.dot_dimension_numbers<[2], [0], [0, 1], [1], [0, 0, 0, 1, 1, 1], [], []>} : vector<2x8x16xf32>, vector<16x8xf32>, vector<2x8x8xf32> -> vector<2x8x8xf32>
    %c0_12 = arith.constant 0 : index
    %c0_13 = arith.constant 0 : index
    %c0_14 = arith.constant 0 : index
    %7 = vector.load %arg4[%c0_12, %c0_13, %c0_14] : memref<4x16x8xf32, #tpu.memory_space<vmem>>, vector<1x16x8xf32>
    %8 = vector.shape_cast %7 : vector<1x16x8xf32> to vector<16x8xf32>
    %cst_15 = arith.constant dense<0.000000e+00> : vector<2x8x8xf32>
    %9 = tpu.matmul %1, %8, %cst_15 {dimension_numbers = #tpu.dot_dimension_numbers<[2], [0], [0, 1], [1], [0, 0, 0, 1, 1, 1], [], []>} : vector<2x8x16xf32>, vector<16x8xf32>, vector<2x8x8xf32> -> vector<2x8x8xf32>
    %c0_16 = arith.constant 0 : index
    %c0_17 = arith.constant 0 : index
    %c0_18 = arith.constant 0 : index
    %10 = vector.load %arg5[%c0_16, %c0_17, %c0_18] : memref<4x16x8xf32, #tpu.memory_space<vmem>>, vector<1x16x8xf32>
    %11 = vector.shape_cast %10 : vector<1x16x8xf32> to vector<16x8xf32>
    %cst_19 = arith.constant dense<0.000000e+00> : vector<2x8x8xf32>
    %12 = tpu.matmul %2, %11, %cst_19 {dimension_numbers = #tpu.dot_dimension_numbers<[2], [0], [0, 1], [1], [0, 0, 0, 1, 1, 1], [], []>} : vector<2x8x16xf32>, vector<16x8xf32>, vector<2x8x8xf32> -> vector<2x8x8xf32>
    "tpu.trace_start"() <{level = 10 : i32, message = "bqd,bkd->bqk"}> : () -> ()
    %cst_20 = arith.constant dense<0.000000e+00> : vector<2x8x8xf32>
    %13 = tpu.matmul %6, %9, %cst_20 {dimension_numbers = #tpu.dot_dimension_numbers<[2], [2], [1], [1], [0, 0, 0, 1, 1, 1], [0], [0]>} : vector<2x8x8xf32>, vector<2x8x8xf32>, vector<2x8x8xf32> -> vector<2x8x8xf32>
    "tpu.trace_stop"() : () -> ()
    %cst_21 = arith.constant dense<0xFF800000> : vector<2x8xf32>
    %14 = vector.multi_reduction <maximumf>, %13, %cst_21 [2] : vector<2x8x8xf32> to vector<2x8xf32>
    %15 = vector.shape_cast %14 : vector<2x8xf32> to vector<2x8x1xf32>
    %16 = vector.broadcast %15 : vector<2x8x1xf32> to vector<2x8x8xf32>
    %17 = arith.subf %13, %16 : vector<2x8x8xf32>
    %18 = math.exp %17 : vector<2x8x8xf32>
    %cst_22 = arith.constant dense<0.000000e+00> : vector<2x8xf32>
    %19 = vector.multi_reduction <add>, %18, %cst_22 [2] : vector<2x8x8xf32> to vector<2x8xf32>
    %20 = vector.shape_cast %19 : vector<2x8xf32> to vector<2x8x1xf32>
    %21 = tpu.reciprocal %20 {approx = true} : vector<2x8x1xf32> -> vector<2x8x1xf32>
    %22 = vector.broadcast %21 : vector<2x8x1xf32> to vector<2x8x8xf32>
    %23 = arith.mulf %18, %22 : vector<2x8x8xf32>
    "tpu.trace_start"() <{level = 10 : i32, message = "bqk,bkd->bqd"}> : () -> ()
    %cst_23 = arith.constant dense<0.000000e+00> : vector<2x8x8xf32>
    %24 = tpu.matmul %23, %12, %cst_23 {dimension_numbers = #tpu.dot_dimension_numbers<[2], [1], [1], [2], [0, 0, 0, 1, 1, 2], [0], [0]>} : vector<2x8x8xf32>, vector<2x8x8xf32>, vector<2x8x8xf32> -> vector<2x8x8xf32>
    "tpu.trace_stop"() : () -> ()
    %c0_24 = arith.constant 0 : index
    %c0_25 = arith.constant 0 : index
    %c0_26 = arith.constant 0 : index
    %25 = vector.load %arg6[%c0_24, %c0_25, %c0_26] : memref<4x8x32xf32, #tpu.memory_space<vmem>>, vector<1x8x32xf32>
    %26 = vector.shape_cast %25 : vector<1x8x32xf32> to vector<8x32xf32>
    %cst_27 = arith.constant dense<0.000000e+00> : vector<2x8x32xf32>
    %27 = tpu.matmul %24, %26, %cst_27 {dimension_numbers = #tpu.dot_dimension_numbers<[2], [0], [0, 1], [1], [0, 0, 0, 1, 1, 1], [], []>} : vector<2x8x8xf32>, vector<8x32xf32>, vector<2x8x32xf32> -> vector<2x8x32xf32>
    %28 = arith.addf %3, %27 : vector<2x8x32xf32>
    %c1 = arith.constant 1 : index
    %c0_28 = arith.constant 0 : index
    %c0_29 = arith.constant 0 : index
    %29 = vector.load %arg3[%c1, %c0_28, %c0_29] : memref<4x16x8xf32, #tpu.memory_space<vmem>>, vector<1x16x8xf32>
    %30 = vector.shape_cast %29 : vector<1x16x8xf32> to vector<16x8xf32>
    %cst_30 = arith.constant dense<0.000000e+00> : vector<2x8x8xf32>
    %31 = tpu.matmul %0, %30, %cst_30 {dimension_numbers = #tpu.dot_dimension_numbers<[2], [0], [0, 1], [1], [0, 0, 0, 1, 1, 1], [], []>} : vector<2x8x16xf32>, vector<16x8xf32>, vector<2x8x8xf32> -> vector<2x8x8xf32>
    %c1_31 = arith.constant 1 : index
    %c0_32 = arith.constant 0 : index
    %c0_33 = arith.constant 0 : index
    %32 = vector.load %arg4[%c1_31, %c0_32, %c0_33] : memref<4x16x8xf32, #tpu.memory_space<vmem>>, vector<1x16x8xf32>
    %33 = vector.shape_cast %32 : vector<1x16x8xf32> to vector<16x8xf32>
    %cst_34 = arith.constant dense<0.000000e+00> : vector<2x8x8xf32>
    %34 = tpu.matmul %1, %33, %cst_34 {dimension_numbers = #tpu.dot_dimension_numbers<[2], [0], [0, 1], [1], [0, 0, 0, 1, 1, 1], [], []>} : vector<2x8x16xf32>, vector<16x8xf32>, vector<2x8x8xf32> -> vector<2x8x8xf32>
    %c1_35 = arith.constant 1 : index
    %c0_36 = arith.constant 0 : index
    %c0_37 = arith.constant 0 : index
    %35 = vector.load %arg5[%c1_35, %c0_36, %c0_37] : memref<4x16x8xf32, #tpu.memory_space<vmem>>, vector<1x16x8xf32>
    %36 = vector.shape_cast %35 : vector<1x16x8xf32> to vector<16x8xf32>
    %cst_38 = arith.constant dense<0.000000e+00> : vector<2x8x8xf32>
    %37 = tpu.matmul %2, %36, %cst_38 {dimension_numbers = #tpu.dot_dimension_numbers<[2], [0], [0, 1], [1], [0, 0, 0, 1, 1, 1], [], []>} : vector<2x8x16xf32>, vector<16x8xf32>, vector<2x8x8xf32> -> vector<2x8x8xf32>
    "tpu.trace_start"() <{level = 10 : i32, message = "bqd,bkd->bqk"}> : () -> ()
    %cst_39 = arith.constant dense<0.000000e+00> : vector<2x8x8xf32>
    %38 = tpu.matmul %31, %34, %cst_39 {dimension_numbers = #tpu.dot_dimension_numbers<[2], [2], [1], [1], [0, 0, 0, 1, 1, 1], [0], [0]>} : vector<2x8x8xf32>, vector<2x8x8xf32>, vector<2x8x8xf32> -> vector<2x8x8xf32>
    "tpu.trace_stop"() : () -> ()
    %cst_40 = arith.constant dense<0xFF800000> : vector<2x8xf32>
    %39 = vector.multi_reduction <maximumf>, %38, %cst_40 [2] : vector<2x8x8xf32> to vector<2x8xf32>
    %40 = vector.shape_cast %39 : vector<2x8xf32> to vector<2x8x1xf32>
    %41 = vector.broadcast %40 : vector<2x8x1xf32> to vector<2x8x8xf32>
    %42 = arith.subf %38, %41 : vector<2x8x8xf32>
    %43 = math.exp %42 : vector<2x8x8xf32>
    %cst_41 = arith.constant dense<0.000000e+00> : vector<2x8xf32>
    %44 = vector.multi_reduction <add>, %43, %cst_41 [2] : vector<2x8x8xf32> to vector<2x8xf32>
    %45 = vector.shape_cast %44 : vector<2x8xf32> to vector<2x8x1xf32>
    %46 = tpu.reciprocal %45 {approx = true} : vector<2x8x1xf32> -> vector<2x8x1xf32>
    %47 = vector.broadcast %46 : vector<2x8x1xf32> to vector<2x8x8xf32>
    %48 = arith.mulf %43, %47 : vector<2x8x8xf32>
    "tpu.trace_start"() <{level = 10 : i32, message = "bqk,bkd->bqd"}> : () -> ()
    %cst_42 = arith.constant dense<0.000000e+00> : vector<2x8x8xf32>
    %49 = tpu.matmul %48, %37, %cst_42 {dimension_numbers = #tpu.dot_dimension_numbers<[2], [1], [1], [2], [0, 0, 0, 1, 1, 2], [0], [0]>} : vector<2x8x8xf32>, vector<2x8x8xf32>, vector<2x8x8xf32> -> vector<2x8x8xf32>
    "tpu.trace_stop"() : () -> ()
    %c1_43 = arith.constant 1 : index
    %c0_44 = arith.constant 0 : index
    %c0_45 = arith.constant 0 : index
    %50 = vector.load %arg6[%c1_43, %c0_44, %c0_45] : memref<4x8x32xf32, #tpu.memory_space<vmem>>, vector<1x8x32xf32>
    %51 = vector.shape_cast %50 : vector<1x8x32xf32> to vector<8x32xf32>
    %cst_46 = arith.constant dense<0.000000e+00> : vector<2x8x32xf32>
    %52 = tpu.matmul %49, %51, %cst_46 {dimension_numbers = #tpu.dot_dimension_numbers<[2], [0], [0, 1], [1], [0, 0, 0, 1, 1, 1], [], []>} : vector<2x8x8xf32>, vector<8x32xf32>, vector<2x8x32xf32> -> vector<2x8x32xf32>
    %53 = arith.addf %28, %52 : vector<2x8x32xf32>
    %c2 = arith.constant 2 : index
    %c0_47 = arith.constant 0 : index
    %c0_48 = arith.constant 0 : index
    %54 = vector.load %arg3[%c2, %c0_47, %c0_48] : memref<4x16x8xf32, #tpu.memory_space<vmem>>, vector<1x16x8xf32>
    %55 = vector.shape_cast %54 : vector<1x16x8xf32> to vector<16x8xf32>
    %cst_49 = arith.constant dense<0.000000e+00> : vector<2x8x8xf32>
    %56 = tpu.matmul %0, %55, %cst_49 {dimension_numbers = #tpu.dot_dimension_numbers<[2], [0], [0, 1], [1], [0, 0, 0, 1, 1, 1], [], []>} : vector<2x8x16xf32>, vector<16x8xf32>, vector<2x8x8xf32> -> vector<2x8x8xf32>
    %c2_50 = arith.constant 2 : index
    %c0_51 = arith.constant 0 : index
    %c0_52 = arith.constant 0 : index
    %57 = vector.load %arg4[%c2_50, %c0_51, %c0_52] : memref<4x16x8xf32, #tpu.memory_space<vmem>>, vector<1x16x8xf32>
    %58 = vector.shape_cast %57 : vector<1x16x8xf32> to vector<16x8xf32>
    %cst_53 = arith.constant dense<0.000000e+00> : vector<2x8x8xf32>
    %59 = tpu.matmul %1, %58, %cst_53 {dimension_numbers = #tpu.dot_dimension_numbers<[2], [0], [0, 1], [1], [0, 0, 0, 1, 1, 1], [], []>} : vector<2x8x16xf32>, vector<16x8xf32>, vector<2x8x8xf32> -> vector<2x8x8xf32>
    %c2_54 = arith.constant 2 : index
    %c0_55 = arith.constant 0 : index
    %c0_56 = arith.constant 0 : index
    %60 = vector.load %arg5[%c2_54, %c0_55, %c0_56] : memref<4x16x8xf32, #tpu.memory_space<vmem>>, vector<1x16x8xf32>
    %61 = vector.shape_cast %60 : vector<1x16x8xf32> to vector<16x8xf32>
    %cst_57 = arith.constant dense<0.000000e+00> : vector<2x8x8xf32>
    %62 = tpu.matmul %2, %61, %cst_57 {dimension_numbers = #tpu.dot_dimension_numbers<[2], [0], [0, 1], [1], [0, 0, 0, 1, 1, 1], [], []>} : vector<2x8x16xf32>, vector<16x8xf32>, vector<2x8x8xf32> -> vector<2x8x8xf32>
    "tpu.trace_start"() <{level = 10 : i32, message = "bqd,bkd->bqk"}> : () -> ()
    %cst_58 = arith.constant dense<0.000000e+00> : vector<2x8x8xf32>
    %63 = tpu.matmul %56, %59, %cst_58 {dimension_numbers = #tpu.dot_dimension_numbers<[2], [2], [1], [1], [0, 0, 0, 1, 1, 1], [0], [0]>} : vector<2x8x8xf32>, vector<2x8x8xf32>, vector<2x8x8xf32> -> vector<2x8x8xf32>
    "tpu.trace_stop"() : () -> ()
    %cst_59 = arith.constant dense<0xFF800000> : vector<2x8xf32>
    %64 = vector.multi_reduction <maximumf>, %63, %cst_59 [2] : vector<2x8x8xf32> to vector<2x8xf32>
    %65 = vector.shape_cast %64 : vector<2x8xf32> to vector<2x8x1xf32>
    %66 = vector.broadcast %65 : vector<2x8x1xf32> to vector<2x8x8xf32>
    %67 = arith.subf %63, %66 : vector<2x8x8xf32>
    %68 = math.exp %67 : vector<2x8x8xf32>
    %cst_60 = arith.constant dense<0.000000e+00> : vector<2x8xf32>
    %69 = vector.multi_reduction <add>, %68, %cst_60 [2] : vector<2x8x8xf32> to vector<2x8xf32>
    %70 = vector.shape_cast %69 : vector<2x8xf32> to vector<2x8x1xf32>
    %71 = tpu.reciprocal %70 {approx = true} : vector<2x8x1xf32> -> vector<2x8x1xf32>
    %72 = vector.broadcast %71 : vector<2x8x1xf32> to vector<2x8x8xf32>
    %73 = arith.mulf %68, %72 : vector<2x8x8xf32>
    "tpu.trace_start"() <{level = 10 : i32, message = "bqk,bkd->bqd"}> : () -> ()
    %cst_61 = arith.constant dense<0.000000e+00> : vector<2x8x8xf32>
    %74 = tpu.matmul %73, %62, %cst_61 {dimension_numbers = #tpu.dot_dimension_numbers<[2], [1], [1], [2], [0, 0, 0, 1, 1, 2], [0], [0]>} : vector<2x8x8xf32>, vector<2x8x8xf32>, vector<2x8x8xf32> -> vector<2x8x8xf32>
    "tpu.trace_stop"() : () -> ()
    %c2_62 = arith.constant 2 : index
    %c0_63 = arith.constant 0 : index
    %c0_64 = arith.constant 0 : index
    %75 = vector.load %arg6[%c2_62, %c0_63, %c0_64] : memref<4x8x32xf32, #tpu.memory_space<vmem>>, vector<1x8x32xf32>
    %76 = vector.shape_cast %75 : vector<1x8x32xf32> to vector<8x32xf32>
    %cst_65 = arith.constant dense<0.000000e+00> : vector<2x8x32xf32>
    %77 = tpu.matmul %74, %76, %cst_65 {dimension_numbers = #tpu.dot_dimension_numbers<[2], [0], [0, 1], [1], [0, 0, 0, 1, 1, 1], [], []>} : vector<2x8x8xf32>, vector<8x32xf32>, vector<2x8x32xf32> -> vector<2x8x32xf32>
    %78 = arith.addf %53, %77 : vector<2x8x32xf32>
    %c3 = arith.constant 3 : index
    %c0_66 = arith.constant 0 : index
    %c0_67 = arith.constant 0 : index
    %79 = vector.load %arg3[%c3, %c0_66, %c0_67] : memref<4x16x8xf32, #tpu.memory_space<vmem>>, vector<1x16x8xf32>
    %80 = vector.shape_cast %79 : vector<1x16x8xf32> to vector<16x8xf32>
    %cst_68 = arith.constant dense<0.000000e+00> : vector<2x8x8xf32>
    %81 = tpu.matmul %0, %80, %cst_68 {dimension_numbers = #tpu.dot_dimension_numbers<[2], [0], [0, 1], [1], [0, 0, 0, 1, 1, 1], [], []>} : vector<2x8x16xf32>, vector<16x8xf32>, vector<2x8x8xf32> -> vector<2x8x8xf32>
    %c3_69 = arith.constant 3 : index
    %c0_70 = arith.constant 0 : index
    %c0_71 = arith.constant 0 : index
    %82 = vector.load %arg4[%c3_69, %c0_70, %c0_71] : memref<4x16x8xf32, #tpu.memory_space<vmem>>, vector<1x16x8xf32>
    %83 = vector.shape_cast %82 : vector<1x16x8xf32> to vector<16x8xf32>
    %cst_72 = arith.constant dense<0.000000e+00> : vector<2x8x8xf32>
    %84 = tpu.matmul %1, %83, %cst_72 {dimension_numbers = #tpu.dot_dimension_numbers<[2], [0], [0, 1], [1], [0, 0, 0, 1, 1, 1], [], []>} : vector<2x8x16xf32>, vector<16x8xf32>, vector<2x8x8xf32> -> vector<2x8x8xf32>
    %c3_73 = arith.constant 3 : index
    %c0_74 = arith.constant 0 : index
    %c0_75 = arith.constant 0 : index
    %85 = vector.load %arg5[%c3_73, %c0_74, %c0_75] : memref<4x16x8xf32, #tpu.memory_space<vmem>>, vector<1x16x8xf32>
    %86 = vector.shape_cast %85 : vector<1x16x8xf32> to vector<16x8xf32>
    %cst_76 = arith.constant dense<0.000000e+00> : vector<2x8x8xf32>
    %87 = tpu.matmul %2, %86, %cst_76 {dimension_numbers = #tpu.dot_dimension_numbers<[2], [0], [0, 1], [1], [0, 0, 0, 1, 1, 1], [], []>} : vector<2x8x16xf32>, vector<16x8xf32>, vector<2x8x8xf32> -> vector<2x8x8xf32>
    "tpu.trace_start"() <{level = 10 : i32, message = "bqd,bkd->bqk"}> : () -> ()
    %cst_77 = arith.constant dense<0.000000e+00> : vector<2x8x8xf32>
    %88 = tpu.matmul %81, %84, %cst_77 {dimension_numbers = #tpu.dot_dimension_numbers<[2], [2], [1], [1], [0, 0, 0, 1, 1, 1], [0], [0]>} : vector<2x8x8xf32>, vector<2x8x8xf32>, vector<2x8x8xf32> -> vector<2x8x8xf32>
    "tpu.trace_stop"() : () -> ()
    %cst_78 = arith.constant dense<0xFF800000> : vector<2x8xf32>
    %89 = vector.multi_reduction <maximumf>, %88, %cst_78 [2] : vector<2x8x8xf32> to vector<2x8xf32>
    %90 = vector.shape_cast %89 : vector<2x8xf32> to vector<2x8x1xf32>
    %91 = vector.broadcast %90 : vector<2x8x1xf32> to vector<2x8x8xf32>
    %92 = arith.subf %88, %91 : vector<2x8x8xf32>
    %93 = math.exp %92 : vector<2x8x8xf32>
    %cst_79 = arith.constant dense<0.000000e+00> : vector<2x8xf32>
    %94 = vector.multi_reduction <add>, %93, %cst_79 [2] : vector<2x8x8xf32> to vector<2x8xf32>
    %95 = vector.shape_cast %94 : vector<2x8xf32> to vector<2x8x1xf32>
    %96 = tpu.reciprocal %95 {approx = true} : vector<2x8x1xf32> -> vector<2x8x1xf32>
    %97 = vector.broadcast %96 : vector<2x8x1xf32> to vector<2x8x8xf32>
    %98 = arith.mulf %93, %97 : vector<2x8x8xf32>
    "tpu.trace_start"() <{level = 10 : i32, message = "bqk,bkd->bqd"}> : () -> ()
    %cst_80 = arith.constant dense<0.000000e+00> : vector<2x8x8xf32>
    %99 = tpu.matmul %98, %87, %cst_80 {dimension_numbers = #tpu.dot_dimension_numbers<[2], [1], [1], [2], [0, 0, 0, 1, 1, 2], [0], [0]>} : vector<2x8x8xf32>, vector<2x8x8xf32>, vector<2x8x8xf32> -> vector<2x8x8xf32>
    "tpu.trace_stop"() : () -> ()
    %c3_81 = arith.constant 3 : index
    %c0_82 = arith.constant 0 : index
    %c0_83 = arith.constant 0 : index
    %100 = vector.load %arg6[%c3_81, %c0_82, %c0_83] : memref<4x8x32xf32, #tpu.memory_space<vmem>>, vector<1x8x32xf32>
    %101 = vector.shape_cast %100 : vector<1x8x32xf32> to vector<8x32xf32>
    %cst_84 = arith.constant dense<0.000000e+00> : vector<2x8x32xf32>
    %102 = tpu.matmul %99, %101, %cst_84 {dimension_numbers = #tpu.dot_dimension_numbers<[2], [0], [0, 1], [1], [0, 0, 0, 1, 1, 1], [], []>} : vector<2x8x8xf32>, vector<8x32xf32>, vector<2x8x32xf32> -> vector<2x8x32xf32>
    %103 = arith.addf %78, %102 : vector<2x8x32xf32>
    %c0_85 = arith.constant 0 : index
    %c0_86 = arith.constant 0 : index
    %c0_87 = arith.constant 0 : index
    %104 = vector.load %arg7[%c0_85, %c0_86, %c0_87] : memref<2x8x32xf32, #tpu.memory_space<vmem>>, vector<2x8x32xf32>
    tpu.vector_store %arg7[%c0_85, %c0_86, %c0_87], %103 {strides = array<i32>} : memref<2x8x32xf32, #tpu.memory_space<vmem>>, vector<2x8x32xf32>,
    return
  }
}

</mosaic_0001>

<llo_original>
// kernel: tpu_custom_call.1
$region0: #{tpu_custom_call.1}
  #allocation0 [shape = 'u32[]', space=smem, size = 0x4, offset = 0x4, fixed_abs, tag = 'smem constant byte address 0x4 - core index']
  #allocation1 [shape = 'u32[72,128]{1,0:T(1,128)}', space=vmem, size = 0x9000, scoped, tag = 'internal scratch']
  %s0 = inlined_call_operand.vmem [shape: f32[2,8,16], index: 0, kind: input, shape index: {}]
  %s1 = inlined_call_operand.vmem [shape: f32[2,8,16], index: 1, kind: input, shape index: {}]
  %s2 = inlined_call_operand.vmem [shape: f32[2,8,16], index: 2, kind: input, shape index: {}]
  %s3 = inlined_call_operand.vmem [shape: f32[4,16,8], index: 3, kind: input, shape index: {}]
  %s4 = inlined_call_operand.vmem [shape: f32[4,16,8], index: 4, kind: input, shape index: {}]
  %s5 = inlined_call_operand.vmem [shape: f32[4,16,8], index: 5, kind: input, shape index: {}]
  %s6 = inlined_call_operand.vmem [shape: f32[4,8,32], index: 6, kind: input, shape index: {}]
  %s7 = inlined_call_operand.hbm [shape: f32[2,8,32], index: 7, kind: output, shape index: {}]
  %s8 = sld [smem:[#allocation0]]
  $region38: #{tpu_custom_call.1} parent=0
    _
  %s10 = ssub.s32 1, %s8
  %s11 = scalar_select 0, %s10, %s8
  $region1: #{tpu_custom_call.1} parent=0
    #allocation2 [shape = 'u8[8192]{0}', space=vmem, size = 0x2000, scoped, tag = 'output window, operand 0, single buffered']
    #allocation3 [shape = 's32[1]{0}', space=sflag, size = 0x4, scoped, tag = 'scoped memory for tpu_custom_call.1']
    %12 = vsyncpa [#allocation3], 0
    // Predicated region
    $region2: #{tpu_custom_call.1} parent=1 // pred_check
      _
    $region3: #{tpu_custom_call.1} parent=1 // pred_check_branch
      %14 = sbr.rel (0) target = $region5
    $region4: #{tpu_custom_call.1} parent=1 // pred_region
      _
    $region5: #{tpu_custom_call.1} parent=1 // pred_fallthru
      _
    // Predicated region
    $region6: #{tpu_custom_call.1} parent=1 // pred_check
      _
    $region7: #{tpu_custom_call.1} parent=1 // pred_check_branch
      %16 = sbr.rel (0) target = $region9
    $region8: #{tpu_custom_call.1} parent=1 // pred_region
      _
    $region9: #{tpu_custom_call.1} parent=1 // pred_fallthru
      _
    // Predicated region
    $region10: #{tpu_custom_call.1} parent=1 // pred_check
      _
    $region11: #{tpu_custom_call.1} parent=1 // pred_check_branch
      %18 = sbr.rel (0) target = $region13
    $region12: #{tpu_custom_call.1} parent=1 // pred_region
      _
    $region13: #{tpu_custom_call.1} parent=1 // pred_fallthru
      _
    // Predicated region
    $region14: #{tpu_custom_call.1} parent=1 // pred_check
      _
    $region15: #{tpu_custom_call.1} parent=1 // pred_check_branch
      %20 = sbr.rel (0) target = $region17
    $region16: #{tpu_custom_call.1} parent=1 // pred_region
      _
    $region17: #{tpu_custom_call.1} parent=1 // pred_fallthru
      _
    // Predicated region
    $region18: #{tpu_custom_call.1} parent=1 // pred_check
      _
    $region19: #{tpu_custom_call.1} parent=1 // pred_check_branch
      %22 = sbr.rel (0) target = $region21
    $region20: #{tpu_custom_call.1} parent=1 // pred_region
      _
    $region21: #{tpu_custom_call.1} parent=1 // pred_fallthru
      _
    // Predicated region
    $region22: #{tpu_custom_call.1} parent=1 // pred_check
      _
    $region23: #{tpu_custom_call.1} parent=1 // pred_check_branch
      %24 = sbr.rel (0) target = $region25
    $region24: #{tpu_custom_call.1} parent=1 // pred_region
      _
    $region25: #{tpu_custom_call.1} parent=1 // pred_fallthru
      _
    // Predicated region
    $region26: #{tpu_custom_call.1} parent=1 // pred_check
      _
    $region27: #{tpu_custom_call.1} parent=1 // pred_check_branch
      %26 = sbr.rel (0) target = $region29
    $region28: #{tpu_custom_call.1} parent=1 // pred_region
      _
    $region29: #{tpu_custom_call.1} parent=1 // pred_fallthru
      _
    %v27 = vld [vmem:[%s0] sm:$0xff]
    %v28 = vld [vmem:[%s0 + $0x8] sm:$0xff]
    %v29 = vld [vmem:[%s1] sm:$0xff]
    %v30 = vld [vmem:[%s1 + $0x8] sm:$0xff]
    %v31 = vld [vmem:[%s2] sm:$0xff]
    %v32 = vld [vmem:[%s2 + $0x8] sm:$0xff]
    %v33 = vld [vmem:[%s3] sm:$0xff]
    %v34 = vld [vmem:[%s3 + $0x8] sm:$0xff]
    %vm35 = vcmask 130048
    %v37 = vsel %vm35, %v27, 0
    %v40 = vsel %vm35, %v28, 0
    %42 = vmatpush.msra.mxu0 0.0
    %43 = vmatpush.msra.mxu0 0.0
    %44 = vmatpush.msra.mxu0 0.0
    %45 = vmatpush.msra.mxu0 0.0
    %46 = vmatpush.msra.mxu0 0.0
    %47 = vmatpush.msra.mxu0 0.0
    %48 = vmatpush.msra.mxu0 0.0
    %49 = vmatpush.msra.mxu0 0.0
    %50 = vmatpush.msra.mxu0 0.0
    %51 = vmatpush.msra.mxu0 0.0
    %52 = vmatpush.msra.mxu0 0.0
    %53 = vmatpush.msra.mxu0 0.0
    %54 = vmatpush.msra.mxu0 0.0
    %55 = vmatpush.msra.mxu0 0.0
    %56 = vmatpush.msra.mxu0 %v34
    %57 = vmatpush.msra.mxu0 %v33
    %58 = vmatmul.f32.gmra.mxu0 %v37
    %v59 = vpop.f32.mrf.mxu0
    %v60 = vadd.f32 0.0, %v59
    %61 = vmatmul.f32.gmra.mxu0 %v40
    %v62 = vpop.f32.mrf.mxu0
    %v63 = vadd.f32 0.0, %v62
    %64 = vdwg.mxu0
    %v65 = vld [vmem:[%s4] sm:$0xff]
    %v66 = vld [vmem:[%s4 + $0x8] sm:$0xff]
    %v68 = vsel %vm35, %v29, 0
    %v71 = vsel %vm35, %v30, 0
    %73 = vmatpush.msra.mxu0 0.0
    %74 = vmatpush.msra.mxu0 0.0
    %75 = vmatpush.msra.mxu0 0.0
    %76 = vmatpush.msra.mxu0 0.0
    %77 = vmatpush.msra.mxu0 0.0
    %78 = vmatpush.msra.mxu0 0.0
    %79 = vmatpush.msra.mxu0 0.0
    %80 = vmatpush.msra.mxu0 0.0
    %81 = vmatpush.msra.mxu0 0.0
    %82 = vmatpush.msra.mxu0 0.0
    %83 = vmatpush.msra.mxu0 0.0
    %84 = vmatpush.msra.mxu0 0.0
    %85 = vmatpush.msra.mxu0 0.0
    %86 = vmatpush.msra.mxu0 0.0
    %87 = vmatpush.msra.mxu0 %v66
    %88 = vmatpush.msra.mxu0 %v65
    %89 = vmatmul.f32.gmra.mxu0 %v68
    %v90 = vpop.f32.mrf.mxu0
    %v91 = vadd.f32 0.0, %v90
    %92 = vmatmul.f32.gmra.mxu0 %v71
    %v93 = vpop.f32.mrf.mxu0
    %v94 = vadd.f32 0.0, %v93
    %95 = vdwg.mxu0
    %v96 = vld [vmem:[%s5] sm:$0xff]
    %v97 = vld [vmem:[%s5 + $0x8] sm:$0xff]
    %v99 = vsel %vm35, %v31, 0
    %v102 = vsel %vm35, %v32, 0
    %104 = vmatpush.msra.mxu0 0.0
    %105 = vmatpush.msra.mxu0 0.0
    %106 = vmatpush.msra.mxu0 0.0
    %107 = vmatpush.msra.mxu0 0.0
    %108 = vmatpush.msra.mxu0 0.0
    %109 = vmatpush.msra.mxu0 0.0
    %110 = vmatpush.msra.mxu0 0.0
    %111 = vmatpush.msra.mxu0 0.0
    %112 = vmatpush.msra.mxu0 0.0
    %113 = vmatpush.msra.mxu0 0.0
    %114 = vmatpush.msra.mxu0 0.0
    %115 = vmatpush.msra.mxu0 0.0
    %116 = vmatpush.msra.mxu0 0.0
    %117 = vmatpush.msra.mxu0 0.0
    %118 = vmatpush.msra.mxu0 %v97
    %119 = vmatpush.msra.mxu0 %v96
    %120 = vmatmul.f32.gmra.mxu0 %v99
    %v121 = vpop.f32.mrf.mxu0
    %v122 = vadd.f32 0.0, %v121
    %123 = vmatmul.f32.gmra.mxu0 %v102
    %v124 = vpop.f32.mrf.mxu0
    %v125 = vadd.f32 0.0, %v124
    %126 = vdwg.mxu0
    %vm127 = vcmask 64512
    %v129 = vsel %vm127, %v60, 0
    %v132 = vsel %vm127, %v91, 0
    %134 = vmatpush.xpose.msra.mxu0 0.0
    %135 = vmatpush.xpose.msra.mxu0 0.0
    %136 = vmatpush.xpose.msra.mxu0 0.0
    %137 = vmatpush.xpose.msra.mxu0 0.0
    %138 = vmatpush.xpose.msra.mxu0 0.0
    %139 = vmatpush.xpose.msra.mxu0 0.0
    %140 = vmatpush.xpose.msra.mxu0 0.0
    %141 = vmatpush.xpose.msra.mxu0 0.0
    %142 = vmatpush.xpose.msra.mxu0 0.0
    %143 = vmatpush.xpose.msra.mxu0 0.0
    %144 = vmatpush.xpose.msra.mxu0 0.0
    %145 = vmatpush.xpose.msra.mxu0 0.0
    %146 = vmatpush.xpose.msra.mxu0 0.0
    %147 = vmatpush.xpose.msra.mxu0 0.0
    %148 = vmatpush.xpose.msra.mxu0 0.0
    %149 = vmatpush.xpose.msra.mxu0 %v132
    %150 = vmatmul.f32.gmra.mxu0 %v129
    %v151 = vpop.f32.mrf.mxu0
    %v152 = vadd.f32 0.0, %v151
    %153 = vdwg.mxu0
    %v155 = vsel %vm127, %v63, 0
    %v158 = vsel %vm127, %v94, 0
    %160 = vmatpush.xpose.msra.mxu0 0.0
    %161 = vmatpush.xpose.msra.mxu0 0.0
    %162 = vmatpush.xpose.msra.mxu0 0.0
    %163 = vmatpush.xpose.msra.mxu0 0.0
    %164 = vmatpush.xpose.msra.mxu0 0.0
    %165 = vmatpush.xpose.msra.mxu0 0.0
    %166 = vmatpush.xpose.msra.mxu0 0.0
    %167 = vmatpush.xpose.msra.mxu0 0.0
    %168 = vmatpush.xpose.msra.mxu0 0.0
    %169 = vmatpush.xpose.msra.mxu0 0.0
    %170 = vmatpush.xpose.msra.mxu0 0.0
    %171 = vmatpush.xpose.msra.mxu0 0.0
    %172 = vmatpush.xpose.msra.mxu0 0.0
    %173 = vmatpush.xpose.msra.mxu0 0.0
    %174 = vmatpush.xpose.msra.mxu0 0.0
    %175 = vmatpush.xpose.msra.mxu0 %v158
    %176 = vmatmul.f32.gmra.mxu0 %v155
    %v177 = vpop.f32.mrf.mxu0
    %v178 = vadd.f32 0.0, %v177
    %179 = vdwg.mxu0
    %v180 = vsel %vm127, %v152, -inf
    %181 = vmax.xlane.f32.xlu0 %v180
    %v182 = vpop.xlane.xlu0 %181
    %v183 = vsel %vm127, %v178, -inf
    %184 = vmax.xlane.f32.xlu0 %v183
    %v185 = vpop.xlane.xlu0 %184
    %v186 = vsub.f32 %v152, %v182
    %v187 = vsub.f32 %v178, %v185
    %v188 = vmul.f32 %v186, 1.442695
    %v189 = vpow.pop %v188
    %v190 = vmul.f32 %v187, 1.442695
    %v191 = vpow.pop %v190
    %v192 = vsel %vm127, %v189, 0.0
    %193 = vadd.xlane.f32.xlu0 %v192
    %v194 = vpop.xlane.xlu0 %193
    %v195 = vsel %vm127, %v191, 0.0
    %196 = vadd.xlane.f32.xlu0 %v195
    %v197 = vpop.xlane.xlu0 %196
    %v198 = vrcp.pop %v194
    %v199 = vrcp.pop %v197
    %v200 = vmul.f32 %v189, %v198
    %v201 = vmul.f32 %v191, %v199
    %v203 = vsel %vm127, %v200, 0
    %205 = vmatpush.msra.mxu0 0.0
    %206 = vmatpush.msra.mxu0 0.0
    %207 = vmatpush.msra.mxu0 0.0
    %208 = vmatpush.msra.mxu0 0.0
    %209 = vmatpush.msra.mxu0 0.0
    %210 = vmatpush.msra.mxu0 0.0
    %211 = vmatpush.msra.mxu0 0.0
    %212 = vmatpush.msra.mxu0 0.0
    %213 = vmatpush.msra.mxu0 0.0
    %214 = vmatpush.msra.mxu0 0.0
    %215 = vmatpush.msra.mxu0 0.0
    %216 = vmatpush.msra.mxu0 0.0
    %217 = vmatpush.msra.mxu0 0.0
    %218 = vmatpush.msra.mxu0 0.0
    %219 = vmatpush.msra.mxu0 0.0
    %220 = vmatpush.msra.mxu0 %v122
    %221 = vmatmul.f32.gmra.mxu0 %v203
    %v222 = vpop.f32.mrf.mxu0
    %v223 = vadd.f32 0.0, %v222
    %224 = vdwg.mxu0
    %v226 = vsel %vm127, %v201, 0
    %228 = vmatpush.msra.mxu0 0.0
    %229 = vmatpush.msra.mxu0 0.0
    %230 = vmatpush.msra.mxu0 0.0
    %231 = vmatpush.msra.mxu0 0.0
    %232 = vmatpush.msra.mxu0 0.0
    %233 = vmatpush.msra.mxu0 0.0
    %234 = vmatpush.msra.mxu0 0.0
    %235 = vmatpush.msra.mxu0 0.0
    %236 = vmatpush.msra.mxu0 0.0
    %237 = vmatpush.msra.mxu0 0.0
    %238 = vmatpush.msra.mxu0 0.0
    %239 = vmatpush.msra.mxu0 0.0
    %240 = vmatpush.msra.mxu0 0.0
    %241 = vmatpush.msra.mxu0 0.0
    %242 = vmatpush.msra.mxu0 0.0
    %243 = vmatpush.msra.mxu0 %v125
    %244 = vmatmul.f32.gmra.mxu0 %v226
    %v245 = vpop.f32.mrf.mxu0
    %v246 = vadd.f32 0.0, %v245
    %247 = vdwg.mxu0
    %v248 = vld [vmem:[%s6] sm:$0xff]
    %s249 = scalar_lea.vmem %s3, 16
    %v250 = vld [vmem:[%s249] sm:$0xff]
    %v251 = vld [vmem:[%s249 + $0x8] sm:$0xff]
    %252 = vmatpush.msra.mxu0 0.0
    %253 = vmatpush.msra.mxu0 0.0
    %254 = vmatpush.msra.mxu0 0.0
    %255 = vmatpush.msra.mxu0 0.0
    %256 = vmatpush.msra.mxu0 0.0
    %257 = vmatpush.msra.mxu0 0.0
    %258 = vmatpush.msra.mxu0 0.0
    %259 = vmatpush.msra.mxu0 0.0
    %260 = vmatpush.msra.mxu0 0.0
    %261 = vmatpush.msra.mxu0 0.0
    %262 = vmatpush.msra.mxu0 0.0
    %263 = vmatpush.msra.mxu0 0.0
    %264 = vmatpush.msra.mxu0 0.0
    %265 = vmatpush.msra.mxu0 0.0
    %266 = vmatpush.msra.mxu0 %v251
    %267 = vmatpush.msra.mxu0 %v250
    %268 = vmatmul.f32.gmra.mxu0 %v37
    %v269 = vpop.f32.mrf.mxu0
    %v270 = vadd.f32 0.0, %v269
    %271 = vmatmul.f32.gmra.mxu0 %v40
    %v272 = vpop.f32.mrf.mxu0
    %v273 = vadd.f32 0.0, %v272
    %274 = vdwg.mxu0
    %s275 = scalar_lea.vmem %s4, 16
    %v276 = vld [vmem:[%s275] sm:$0xff]
    %v277 = vld [vmem:[%s275 + $0x8] sm:$0xff]
    %278 = vmatpush.msra.mxu0 0.0
    %279 = vmatpush.msra.mxu0 0.0
    %280 = vmatpush.msra.mxu0 0.0
    %281 = vmatpush.msra.mxu0 0.0
    %282 = vmatpush.msra.mxu0 0.0
    %283 = vmatpush.msra.mxu0 0.0
    %284 = vmatpush.msra.mxu0 0.0
    %285 = vmatpush.msra.mxu0 0.0
    %286 = vmatpush.msra.mxu0 0.0
    %287 = vmatpush.msra.mxu0 0.0
    %288 = vmatpush.msra.mxu0 0.0
    %289 = vmatpush.msra.mxu0 0.0
    %290 = vmatpush.msra.mxu0 0.0
    %291 = vmatpush.msra.mxu0 0.0
    %292 = vmatpush.msra.mxu0 %v277
    %293 = vmatpush.msra.mxu0 %v276
    %294 = vmatmul.f32.gmra.mxu0 %v68
    %v295 = vpop.f32.mrf.mxu0
    %v296 = vadd.f32 0.0, %v295
    %297 = vmatmul.f32.gmra.mxu0 %v71
    %v298 = vpop.f32.mrf.mxu0
    %v299 = vadd.f32 0.0, %v298
    %300 = vdwg.mxu0
    %s301 = scalar_lea.vmem %s5, 16
    %v302 = vld [vmem:[%s301] sm:$0xff]
    %v303 = vld [vmem:[%s301 + $0x8] sm:$0xff]
    %304 = vmatpush.msra.mxu0 0.0
    %305 = vmatpush.msra.mxu0 0.0
    %306 = vmatpush.msra.mxu0 0.0
    %307 = vmatpush.msra.mxu0 0.0
    %308 = vmatpush.msra.mxu0 0.0
    %309 = vmatpush.msra.mxu0 0.0
    %310 = vmatpush.msra.mxu0 0.0
    %311 = vmatpush.msra.mxu0 0.0
    %312 = vmatpush.msra.mxu0 0.0
    %313 = vmatpush.msra.mxu0 0.0
    %314 = vmatpush.msra.mxu0 0.0
    %315 = vmatpush.msra.mxu0 0.0
    %316 = vmatpush.msra.mxu0 0.0
    %317 = vmatpush.msra.mxu0 0.0
    %318 = vmatpush.msra.mxu0 %v303
    %319 = vmatpush.msra.mxu0 %v302
    %320 = vmatmul.f32.gmra.mxu0 %v99
    %v321 = vpop.f32.mrf.mxu0
    %v322 = vadd.f32 0.0, %v321
    %323 = vmatmul.f32.gmra.mxu0 %v102
    %v324 = vpop.f32.mrf.mxu0
    %v325 = vadd.f32 0.0, %v324
    %326 = vdwg.mxu0
    %v328 = vsel %vm127, %v270, 0
    %v331 = vsel %vm127, %v296, 0
    %333 = vmatpush.xpose.msra.mxu0 0.0
    %334 = vmatpush.xpose.msra.mxu0 0.0
    %335 = vmatpush.xpose.msra.mxu0 0.0
    %336 = vmatpush.xpose.msra.mxu0 0.0
    %337 = vmatpush.xpose.msra.mxu0 0.0
    %338 = vmatpush.xpose.msra.mxu0 0.0
    %339 = vmatpush.xpose.msra.mxu0 0.0
    %340 = vmatpush.xpose.msra.mxu0 0.0
    %341 = vmatpush.xpose.msra.mxu0 0.0
    %342 = vmatpush.xpose.msra.mxu0 0.0
    %343 = vmatpush.xpose.msra.mxu0 0.0
    %344 = vmatpush.xpose.msra.mxu0 0.0
    %345 = vmatpush.xpose.msra.mxu0 0.0
    %346 = vmatpush.xpose.msra.mxu0 0.0
    %347 = vmatpush.xpose.msra.mxu0 0.0
    %348 = vmatpush.xpose.msra.mxu0 %v331
    %349 = vmatmul.f32.gmra.mxu0 %v328
    %v350 = vpop.f32.mrf.mxu0
    %v351 = vadd.f32 0.0, %v350
    %352 = vdwg.mxu0
    %v354 = vsel %vm127, %v273, 0
    %v357 = vsel %vm127, %v299, 0
    %359 = vmatpush.xpose.msra.mxu0 0.0
    %360 = vmatpush.xpose.msra.mxu0 0.0
    %361 = vmatpush.xpose.msra.mxu0 0.0
    %362 = vmatpush.xpose.msra.mxu0 0.0
    %363 = vmatpush.xpose.msra.mxu0 0.0
    %364 = vmatpush.xpose.msra.mxu0 0.0
    %365 = vmatpush.xpose.msra.mxu0 0.0
    %366 = vmatpush.xpose.msra.mxu0 0.0
    %367 = vmatpush.xpose.msra.mxu0 0.0
    %368 = vmatpush.xpose.msra.mxu0 0.0
    %369 = vmatpush.xpose.msra.mxu0 0.0
    %370 = vmatpush.xpose.msra.mxu0 0.0
    %371 = vmatpush.xpose.msra.mxu0 0.0
    %372 = vmatpush.xpose.msra.mxu0 0.0
    %373 = vmatpush.xpose.msra.mxu0 0.0
    %374 = vmatpush.xpose.msra.mxu0 %v357
    %375 = vmatmul.f32.gmra.mxu0 %v354
    %v376 = vpop.f32.mrf.mxu0
    %v377 = vadd.f32 0.0, %v376
    %378 = vdwg.mxu0
    %v379 = vsel %vm127, %v351, -inf
    %380 = vmax.xlane.f32.xlu0 %v379
    %v381 = vpop.xlane.xlu0 %380
    %v382 = vsel %vm127, %v377, -inf
    %383 = vmax.xlane.f32.xlu0 %v382
    %v384 = vpop.xlane.xlu0 %383
    %v385 = vsub.f32 %v351, %v381
    %v386 = vsub.f32 %v377, %v384
    %v387 = vmul.f32 %v385, 1.442695
    %v388 = vpow.pop %v387
    %v389 = vmul.f32 %v386, 1.442695
    %v390 = vpow.pop %v389
    %v391 = vsel %vm127, %v388, 0.0
    %392 = vadd.xlane.f32.xlu0 %v391
    %v393 = vpop.xlane.xlu0 %392
    %v394 = vsel %vm127, %v390, 0.0
    %395 = vadd.xlane.f32.xlu0 %v394
    %v396 = vpop.xlane.xlu0 %395
    %v397 = vrcp.pop %v393
    %v398 = vrcp.pop %v396
    %v399 = vmul.f32 %v388, %v397
    %v400 = vmul.f32 %v390, %v398
    %v402 = vsel %vm127, %v399, 0
    %404 = vmatpush.msra.mxu0 0.0
    %405 = vmatpush.msra.mxu0 0.0
    %406 = vmatpush.msra.mxu0 0.0
    %407 = vmatpush.msra.mxu0 0.0
    %408 = vmatpush.msra.mxu0 0.0
    %409 = vmatpush.msra.mxu0 0.0
    %410 = vmatpush.msra.mxu0 0.0
    %411 = vmatpush.msra.mxu0 0.0
    %412 = vmatpush.msra.mxu0 0.0
    %413 = vmatpush.msra.mxu0 0.0
    %414 = vmatpush.msra.mxu0 0.0
    %415 = vmatpush.msra.mxu0 0.0
    %416 = vmatpush.msra.mxu0 0.0
    %417 = vmatpush.msra.mxu0 0.0
    %418 = vmatpush.msra.mxu0 0.0
    %419 = vmatpush.msra.mxu0 %v322
    %420 = vmatmul.f32.gmra.mxu0 %v402
    %v421 = vpop.f32.mrf.mxu0
    %v422 = vadd.f32 0.0, %v421
    %423 = vdwg.mxu0
    %v425 = vsel %vm127, %v400, 0
    %427 = vmatpush.msra.mxu0 0.0
    %428 = vmatpush.msra.mxu0 0.0
    %429 = vmatpush.msra.mxu0 0.0
    %430 = vmatpush.msra.mxu0 0.0
    %431 = vmatpush.msra.mxu0 0.0
    %432 = vmatpush.msra.mxu0 0.0
    %433 = vmatpush.msra.mxu0 0.0
    %434 = vmatpush.msra.mxu0 0.0
    %435 = vmatpush.msra.mxu0 0.0
    %436 = vmatpush.msra.mxu0 0.0
    %437 = vmatpush.msra.mxu0 0.0
    %438 = vmatpush.msra.mxu0 0.0
    %439 = vmatpush.msra.mxu0 0.0
    %440 = vmatpush.msra.mxu0 0.0
    %441 = vmatpush.msra.mxu0 0.0
    %442 = vmatpush.msra.mxu0 %v325
    %443 = vmatmul.f32.gmra.mxu0 %v425
    %v444 = vpop.f32.mrf.mxu0
    %v445 = vadd.f32 0.0, %v444
    %446 = vdwg.mxu0
    %s447 = scalar_lea.vmem %s6, 8
    %v448 = vld [vmem:[%s447] sm:$0xff]
    %v450 = vsel %vm127, %v422, 0
    %v453 = vsel %vm127, %v445, 0
    %455 = vmatpush.msra.mxu0 0.0
    %456 = vmatpush.msra.mxu0 0.0
    %457 = vmatpush.msra.mxu0 0.0
    %458 = vmatpush.msra.mxu0 0.0
    %459 = vmatpush.msra.mxu0 0.0
    %460 = vmatpush.msra.mxu0 0.0
    %461 = vmatpush.msra.mxu0 0.0
    %462 = vmatpush.msra.mxu0 0.0
    %463 = vmatpush.msra.mxu0 0.0
    %464 = vmatpush.msra.mxu0 0.0
    %465 = vmatpush.msra.mxu0 0.0
    %466 = vmatpush.msra.mxu0 0.0
    %467 = vmatpush.msra.mxu0 0.0
    %468 = vmatpush.msra.mxu0 0.0
    %469 = vmatpush.msra.mxu0 0.0
    %470 = vmatpush.msra.mxu0 %v448
    %471 = vmatmul.f32.gmra.mxu0 %v450
    %v472 = vpop.f32.mrf.mxu0
    %v473 = vadd.f32 0.0, %v472
    %474 = vmatmul.f32.gmra.mxu0 %v453
    %v475 = vpop.f32.mrf.mxu0
    %v476 = vadd.f32 0.0, %v475
    %477 = vdwg.mxu0
    %v479 = vsel %vm127, %v223, 0
    %v482 = vsel %vm127, %v246, 0
    %484 = vmatpush.msra.mxu0 0.0
    %485 = vmatpush.msra.mxu0 0.0
    %486 = vmatpush.msra.mxu0 0.0
    %487 = vmatpush.msra.mxu0 0.0
    %488 = vmatpush.msra.mxu0 0.0
    %489 = vmatpush.msra.mxu0 0.0
    %490 = vmatpush.msra.mxu0 0.0
    %491 = vmatpush.msra.mxu0 0.0
    %492 = vmatpush.msra.mxu0 0.0
    %493 = vmatpush.msra.mxu0 0.0
    %494 = vmatpush.msra.mxu0 0.0
    %495 = vmatpush.msra.mxu0 0.0
    %496 = vmatpush.msra.mxu0 0.0
    %497 = vmatpush.msra.mxu0 0.0
    %498 = vmatpush.msra.mxu0 0.0
    %499 = vmatpush.msra.mxu0 %v248
    %500 = vmatmul.f32.gmra.mxu0 %v479
    %v501 = vpop.f32.mrf.mxu0
    %v502 = vadd.f32 %v473, %v501
    %503 = vmatmul.f32.gmra.mxu0 %v482
    %v504 = vpop.f32.mrf.mxu0
    %v505 = vadd.f32 %v476, %v504
    %506 = vdwg.mxu0
    %s507 = scalar_lea.vmem %s3, 32
    %v508 = vld [vmem:[%s507] sm:$0xff]
    %v509 = vld [vmem:[%s507 + $0x8] sm:$0xff]
    %510 = vmatpush.msra.mxu0 0.0
    %511 = vmatpush.msra.mxu0 0.0
    %512 = vmatpush.msra.mxu0 0.0
    %513 = vmatpush.msra.mxu0 0.0
    %514 = vmatpush.msra.mxu0 0.0
    %515 = vmatpush.msra.mxu0 0.0
    %516 = vmatpush.msra.mxu0 0.0
    %517 = vmatpush.msra.mxu0 0.0
    %518 = vmatpush.msra.mxu0 0.0
    %519 = vmatpush.msra.mxu0 0.0
    %520 = vmatpush.msra.mxu0 0.0
    %521 = vmatpush.msra.mxu0 0.0
    %522 = vmatpush.msra.mxu0 0.0
    %523 = vmatpush.msra.mxu0 0.0
    %524 = vmatpush.msra.mxu0 %v509
    %525 = vmatpush.msra.mxu0 %v508
    %526 = vmatmul.f32.gmra.mxu0 %v37
    %v527 = vpop.f32.mrf.mxu0
    %v528 = vadd.f32 0.0, %v527
    %529 = vmatmul.f32.gmra.mxu0 %v40
    %v530 = vpop.f32.mrf.mxu0
    %v531 = vadd.f32 0.0, %v530
    %532 = vdwg.mxu0
    %s533 = scalar_lea.vmem %s4, 32
    %v534 = vld [vmem:[%s533] sm:$0xff]
    %v535 = vld [vmem:[%s533 + $0x8] sm:$0xff]
    %536 = vmatpush.msra.mxu0 0.0
    %537 = vmatpush.msra.mxu0 0.0
    %538 = vmatpush.msra.mxu0 0.0
    %539 = vmatpush.msra.mxu0 0.0
    %540 = vmatpush.msra.mxu0 0.0
    %541 = vmatpush.msra.mxu0 0.0
    %542 = vmatpush.msra.mxu0 0.0
    %543 = vmatpush.msra.mxu0 0.0
    %544 = vmatpush.msra.mxu0 0.0
    %545 = vmatpush.msra.mxu0 0.0
    %546 = vmatpush.msra.mxu0 0.0
    %547 = vmatpush.msra.mxu0 0.0
    %548 = vmatpush.msra.mxu0 0.0
    %549 = vmatpush.msra.mxu0 0.0
    %550 = vmatpush.msra.mxu0 %v535
    %551 = vmatpush.msra.mxu0 %v534
    %552 = vmatmul.f32.gmra.mxu0 %v68
    %v553 = vpop.f32.mrf.mxu0
    %v554 = vadd.f32 0.0, %v553
    %555 = vmatmul.f32.gmra.mxu0 %v71
    %v556 = vpop.f32.mrf.mxu0
    %v557 = vadd.f32 0.0, %v556
    %558 = vdwg.mxu0
    %s559 = scalar_lea.vmem %s5, 32
    %v560 = vld [vmem:[%s559] sm:$0xff]
    %v561 = vld [vmem:[%s559 + $0x8] sm:$0xff]
    %562 = vmatpush.msra.mxu0 0.0
    %563 = vmatpush.msra.mxu0 0.0
    %564 = vmatpush.msra.mxu0 0.0
    %565 = vmatpush.msra.mxu0 0.0
    %566 = vmatpush.msra.mxu0 0.0
    %567 = vmatpush.msra.mxu0 0.0
    %568 = vmatpush.msra.mxu0 0.0
    %569 = vmatpush.msra.mxu0 0.0
    %570 = vmatpush.msra.mxu0 0.0
    %571 = vmatpush.msra.mxu0 0.0
    %572 = vmatpush.msra.mxu0 0.0
    %573 = vmatpush.msra.mxu0 0.0
    %574 = vmatpush.msra.mxu0 0.0
    %575 = vmatpush.msra.mxu0 0.0
    %576 = vmatpush.msra.mxu0 %v561
    %577 = vmatpush.msra.mxu0 %v560
    %578 = vmatmul.f32.gmra.mxu0 %v99
    %v579 = vpop.f32.mrf.mxu0
    %v580 = vadd.f32 0.0, %v579
    %581 = vmatmul.f32.gmra.mxu0 %v102
    %v582 = vpop.f32.mrf.mxu0
    %v583 = vadd.f32 0.0, %v582
    %584 = vdwg.mxu0
    %v586 = vsel %vm127, %v528, 0
    %v589 = vsel %vm127, %v554, 0
    %591 = vmatpush.xpose.msra.mxu0 0.0
    %592 = vmatpush.xpose.msra.mxu0 0.0
    %593 = vmatpush.xpose.msra.mxu0 0.0
    %594 = vmatpush.xpose.msra.mxu0 0.0
    %595 = vmatpush.xpose.msra.mxu0 0.0
    %596 = vmatpush.xpose.msra.mxu0 0.0
    %597 = vmatpush.xpose.msra.mxu0 0.0
    %598 = vmatpush.xpose.msra.mxu0 0.0
    %599 = vmatpush.xpose.msra.mxu0 0.0
    %600 = vmatpush.xpose.msra.mxu0 0.0
    %601 = vmatpush.xpose.msra.mxu0 0.0
    %602 = vmatpush.xpose.msra.mxu0 0.0
    %603 = vmatpush.xpose.msra.mxu0 0.0
    %604 = vmatpush.xpose.msra.mxu0 0.0
    %605 = vmatpush.xpose.msra.mxu0 0.0
    %606 = vmatpush.xpose.msra.mxu0 %v589
    %607 = vmatmul.f32.gmra.mxu0 %v586
    %v608 = vpop.f32.mrf.mxu0
    %v609 = vadd.f32 0.0, %v608
    %610 = vdwg.mxu0
    %v612 = vsel %vm127, %v531, 0
    %v615 = vsel %vm127, %v557, 0
    %617 = vmatpush.xpose.msra.mxu0 0.0
    %618 = vmatpush.xpose.msra.mxu0 0.0
    %619 = vmatpush.xpose.msra.mxu0 0.0
    %620 = vmatpush.xpose.msra.mxu0 0.0
    %621 = vmatpush.xpose.msra.mxu0 0.0
    %622 = vmatpush.xpose.msra.mxu0 0.0
    %623 = vmatpush.xpose.msra.mxu0 0.0
    %624 = vmatpush.xpose.msra.mxu0 0.0
    %625 = vmatpush.xpose.msra.mxu0 0.0
    %626 = vmatpush.xpose.msra.mxu0 0.0
    %627 = vmatpush.xpose.msra.mxu0 0.0
    %628 = vmatpush.xpose.msra.mxu0 0.0
    %629 = vmatpush.xpose.msra.mxu0 0.0
    %630 = vmatpush.xpose.msra.mxu0 0.0
    %631 = vmatpush.xpose.msra.mxu0 0.0
    %632 = vmatpush.xpose.msra.mxu0 %v615
    %633 = vmatmul.f32.gmra.mxu0 %v612
    %v634 = vpop.f32.mrf.mxu0
    %v635 = vadd.f32 0.0, %v634
    %636 = vdwg.mxu0
    %v637 = vsel %vm127, %v609, -inf
    %638 = vmax.xlane.f32.xlu0 %v637
    %v639 = vpop.xlane.xlu0 %638
    %v640 = vsel %vm127, %v635, -inf
    %641 = vmax.xlane.f32.xlu0 %v640
    %v642 = vpop.xlane.xlu0 %641
    %v643 = vsub.f32 %v609, %v639
    %v644 = vsub.f32 %v635, %v642
    %v645 = vmul.f32 %v643, 1.442695
    %v646 = vpow.pop %v645
    %v647 = vmul.f32 %v644, 1.442695
    %v648 = vpow.pop %v647
    %v649 = vsel %vm127, %v646, 0.0
    %650 = vadd.xlane.f32.xlu0 %v649
    %v651 = vpop.xlane.xlu0 %650
    %v652 = vsel %vm127, %v648, 0.0
    %653 = vadd.xlane.f32.xlu0 %v652
    %v654 = vpop.xlane.xlu0 %653
    %v655 = vrcp.pop %v651
    %v656 = vrcp.pop %v654
    %v657 = vmul.f32 %v646, %v655
    %v658 = vmul.f32 %v648, %v656
    %v660 = vsel %vm127, %v657, 0
    %662 = vmatpush.msra.mxu0 0.0
    %663 = vmatpush.msra.mxu0 0.0
    %664 = vmatpush.msra.mxu0 0.0
    %665 = vmatpush.msra.mxu0 0.0
    %666 = vmatpush.msra.mxu0 0.0
    %667 = vmatpush.msra.mxu0 0.0
    %668 = vmatpush.msra.mxu0 0.0
    %669 = vmatpush.msra.mxu0 0.0
    %670 = vmatpush.msra.mxu0 0.0
    %671 = vmatpush.msra.mxu0 0.0
    %672 = vmatpush.msra.mxu0 0.0
    %673 = vmatpush.msra.mxu0 0.0
    %674 = vmatpush.msra.mxu0 0.0
    %675 = vmatpush.msra.mxu0 0.0
    %676 = vmatpush.msra.mxu0 0.0
    %677 = vmatpush.msra.mxu0 %v580
    %678 = vmatmul.f32.gmra.mxu0 %v660
    %v679 = vpop.f32.mrf.mxu0
    %v680 = vadd.f32 0.0, %v679
    %681 = vdwg.mxu0
    %v683 = vsel %vm127, %v658, 0
    %685 = vmatpush.msra.mxu0 0.0
    %686 = vmatpush.msra.mxu0 0.0
    %687 = vmatpush.msra.mxu0 0.0
    %688 = vmatpush.msra.mxu0 0.0
    %689 = vmatpush.msra.mxu0 0.0
    %690 = vmatpush.msra.mxu0 0.0
    %691 = vmatpush.msra.mxu0 0.0
    %692 = vmatpush.msra.mxu0 0.0
    %693 = vmatpush.msra.mxu0 0.0
    %694 = vmatpush.msra.mxu0 0.0
    %695 = vmatpush.msra.mxu0 0.0
    %696 = vmatpush.msra.mxu0 0.0
    %697 = vmatpush.msra.mxu0 0.0
    %698 = vmatpush.msra.mxu0 0.0
    %699 = vmatpush.msra.mxu0 0.0
    %700 = vmatpush.msra.mxu0 %v583
    %701 = vmatmul.f32.gmra.mxu0 %v683
    %v702 = vpop.f32.mrf.mxu0
    %v703 = vadd.f32 0.0, %v702
    %704 = vdwg.mxu0
    %s705 = scalar_lea.vmem %s6, 16
    %v706 = vld [vmem:[%s705] sm:$0xff]
    %v708 = vsel %vm127, %v680, 0
    %v711 = vsel %vm127, %v703, 0
    %713 = vmatpush.msra.mxu0 0.0
    %714 = vmatpush.msra.mxu0 0.0
    %715 = vmatpush.msra.mxu0 0.0
    %716 = vmatpush.msra.mxu0 0.0
    %717 = vmatpush.msra.mxu0 0.0
    %718 = vmatpush.msra.mxu0 0.0
    %719 = vmatpush.msra.mxu0 0.0
    %720 = vmatpush.msra.mxu0 0.0
    %721 = vmatpush.msra.mxu0 0.0
    %722 = vmatpush.msra.mxu0 0.0
    %723 = vmatpush.msra.mxu0 0.0
    %724 = vmatpush.msra.mxu0 0.0
    %725 = vmatpush.msra.mxu0 0.0
    %726 = vmatpush.msra.mxu0 0.0
    %727 = vmatpush.msra.mxu0 0.0
    %728 = vmatpush.msra.mxu0 %v706
    %729 = vmatmul.f32.gmra.mxu0 %v708
    %v730 = vpop.f32.mrf.mxu0
    %v731 = vadd.f32 0.0, %v730
    %732 = vmatmul.f32.gmra.mxu0 %v711
    %v733 = vpop.f32.mrf.mxu0
    %v734 = vadd.f32 0.0, %v733
    %735 = vdwg.mxu0
    %v736 = vadd.f32 %v502, %v731
    %v737 = vadd.f32 %v505, %v734
    %s738 = scalar_lea.vmem %s3, 48
    %v739 = vld [vmem:[%s738] sm:$0xff]
    %v740 = vld [vmem:[%s738 + $0x8] sm:$0xff]
    %741 = vmatpush.msra.mxu0 0.0
    %742 = vmatpush.msra.mxu0 0.0
    %743 = vmatpush.msra.mxu0 0.0
    %744 = vmatpush.msra.mxu0 0.0
    %745 = vmatpush.msra.mxu0 0.0
    %746 = vmatpush.msra.mxu0 0.0
    %747 = vmatpush.msra.mxu0 0.0
    %748 = vmatpush.msra.mxu0 0.0
    %749 = vmatpush.msra.mxu0 0.0
    %750 = vmatpush.msra.mxu0 0.0
    %751 = vmatpush.msra.mxu0 0.0
    %752 = vmatpush.msra.mxu0 0.0
    %753 = vmatpush.msra.mxu0 0.0
    %754 = vmatpush.msra.mxu0 0.0
    %755 = vmatpush.msra.mxu0 %v740
    %756 = vmatpush.msra.mxu0 %v739
    %757 = vmatmul.f32.gmra.mxu0 %v37
    %v758 = vpop.f32.mrf.mxu0
    %v759 = vadd.f32 0.0, %v758
    %760 = vmatmul.f32.gmra.mxu0 %v40
    %v761 = vpop.f32.mrf.mxu0
    %v762 = vadd.f32 0.0, %v761
    %763 = vdwg.mxu0
    %s764 = scalar_lea.vmem %s4, 48
    %v765 = vld [vmem:[%s764] sm:$0xff]
    %v766 = vld [vmem:[%s764 + $0x8] sm:$0xff]
    %767 = vmatpush.msra.mxu0 0.0
    %768 = vmatpush.msra.mxu0 0.0
    %769 = vmatpush.msra.mxu0 0.0
    %770 = vmatpush.msra.mxu0 0.0
    %771 = vmatpush.msra.mxu0 0.0
    %772 = vmatpush.msra.mxu0 0.0
    %773 = vmatpush.msra.mxu0 0.0
    %774 = vmatpush.msra.mxu0 0.0
    %775 = vmatpush.msra.mxu0 0.0
    %776 = vmatpush.msra.mxu0 0.0
    %777 = vmatpush.msra.mxu0 0.0
    %778 = vmatpush.msra.mxu0 0.0
    %779 = vmatpush.msra.mxu0 0.0
    %780 = vmatpush.msra.mxu0 0.0
    %781 = vmatpush.msra.mxu0 %v766
    %782 = vmatpush.msra.mxu0 %v765
    %783 = vmatmul.f32.gmra.mxu0 %v68
    %v784 = vpop.f32.mrf.mxu0
    %v785 = vadd.f32 0.0, %v784
    %786 = vmatmul.f32.gmra.mxu0 %v71
    %v787 = vpop.f32.mrf.mxu0
    %v788 = vadd.f32 0.0, %v787
    %789 = vdwg.mxu0
    %s790 = scalar_lea.vmem %s5, 48
    %v791 = vld [vmem:[%s790] sm:$0xff]
    %v792 = vld [vmem:[%s790 + $0x8] sm:$0xff]
    %793 = vmatpush.msra.mxu0 0.0
    %794 = vmatpush.msra.mxu0 0.0
    %795 = vmatpush.msra.mxu0 0.0
    %796 = vmatpush.msra.mxu0 0.0
    %797 = vmatpush.msra.mxu0 0.0
    %798 = vmatpush.msra.mxu0 0.0
    %799 = vmatpush.msra.mxu0 0.0
    %800 = vmatpush.msra.mxu0 0.0
    %801 = vmatpush.msra.mxu0 0.0
    %802 = vmatpush.msra.mxu0 0.0
    %803 = vmatpush.msra.mxu0 0.0
    %804 = vmatpush.msra.mxu0 0.0
    %805 = vmatpush.msra.mxu0 0.0
    %806 = vmatpush.msra.mxu0 0.0
    %807 = vmatpush.msra.mxu0 %v792
    %808 = vmatpush.msra.mxu0 %v791
    %809 = vmatmul.f32.gmra.mxu0 %v99
    %v810 = vpop.f32.mrf.mxu0
    %v811 = vadd.f32 0.0, %v810
    %812 = vmatmul.f32.gmra.mxu0 %v102
    %v813 = vpop.f32.mrf.mxu0
    %v814 = vadd.f32 0.0, %v813
    %815 = vdwg.mxu0
    %v817 = vsel %vm127, %v759, 0
    %v820 = vsel %vm127, %v785, 0
    %822 = vmatpush.xpose.msra.mxu0 0.0
    %823 = vmatpush.xpose.msra.mxu0 0.0
    %824 = vmatpush.xpose.msra.mxu0 0.0
    %825 = vmatpush.xpose.msra.mxu0 0.0
    %826 = vmatpush.xpose.msra.mxu0 0.0
    %827 = vmatpush.xpose.msra.mxu0 0.0
    %828 = vmatpush.xpose.msra.mxu0 0.0
    %829 = vmatpush.xpose.msra.mxu0 0.0
    %830 = vmatpush.xpose.msra.mxu0 0.0
    %831 = vmatpush.xpose.msra.mxu0 0.0
    %832 = vmatpush.xpose.msra.mxu0 0.0
    %833 = vmatpush.xpose.msra.mxu0 0.0
    %834 = vmatpush.xpose.msra.mxu0 0.0
    %835 = vmatpush.xpose.msra.mxu0 0.0
    %836 = vmatpush.xpose.msra.mxu0 0.0
    %837 = vmatpush.xpose.msra.mxu0 %v820
    %838 = vmatmul.f32.gmra.mxu0 %v817
    %v839 = vpop.f32.mrf.mxu0
    %v840 = vadd.f32 0.0, %v839
    %841 = vdwg.mxu0
    %v843 = vsel %vm127, %v762, 0
    %v846 = vsel %vm127, %v788, 0
    %848 = vmatpush.xpose.msra.mxu0 0.0
    %849 = vmatpush.xpose.msra.mxu0 0.0
    %850 = vmatpush.xpose.msra.mxu0 0.0
    %851 = vmatpush.xpose.msra.mxu0 0.0
    %852 = vmatpush.xpose.msra.mxu0 0.0
    %853 = vmatpush.xpose.msra.mxu0 0.0
    %854 = vmatpush.xpose.msra.mxu0 0.0
    %855 = vmatpush.xpose.msra.mxu0 0.0
    %856 = vmatpush.xpose.msra.mxu0 0.0
    %857 = vmatpush.xpose.msra.mxu0 0.0
    %858 = vmatpush.xpose.msra.mxu0 0.0
    %859 = vmatpush.xpose.msra.mxu0 0.0
    %860 = vmatpush.xpose.msra.mxu0 0.0
    %861 = vmatpush.xpose.msra.mxu0 0.0
    %862 = vmatpush.xpose.msra.mxu0 0.0
    %863 = vmatpush.xpose.msra.mxu0 %v846
    %864 = vmatmul.f32.gmra.mxu0 %v843
    %v865 = vpop.f32.mrf.mxu0
    %v866 = vadd.f32 0.0, %v865
    %867 = vdwg.mxu0
    %v868 = vsel %vm127, %v840, -inf
    %869 = vmax.xlane.f32.xlu0 %v868
    %v870 = vpop.xlane.xlu0 %869
    %v871 = vsel %vm127, %v866, -inf
    %872 = vmax.xlane.f32.xlu0 %v871
    %v873 = vpop.xlane.xlu0 %872
    %v874 = vsub.f32 %v840, %v870
    %v875 = vsub.f32 %v866, %v873
    %v876 = vmul.f32 %v874, 1.442695
    %v877 = vpow.pop %v876
    %v878 = vmul.f32 %v875, 1.442695
    %v879 = vpow.pop %v878
    %v880 = vsel %vm127, %v877, 0.0
    %881 = vadd.xlane.f32.xlu0 %v880
    %v882 = vpop.xlane.xlu0 %881
    %v883 = vsel %vm127, %v879, 0.0
    %884 = vadd.xlane.f32.xlu0 %v883
    %v885 = vpop.xlane.xlu0 %884
    %v886 = vrcp.pop %v882
    %v887 = vrcp.pop %v885
    %v888 = vmul.f32 %v877, %v886
    %v889 = vmul.f32 %v879, %v887
    %v891 = vsel %vm127, %v888, 0
    %893 = vmatpush.msra.mxu0 0.0
    %894 = vmatpush.msra.mxu0 0.0
    %895 = vmatpush.msra.mxu0 0.0
    %896 = vmatpush.msra.mxu0 0.0
    %897 = vmatpush.msra.mxu0 0.0
    %898 = vmatpush.msra.mxu0 0.0
    %899 = vmatpush.msra.mxu0 0.0
    %900 = vmatpush.msra.mxu0 0.0
    %901 = vmatpush.msra.mxu0 0.0
    %902 = vmatpush.msra.mxu0 0.0
    %903 = vmatpush.msra.mxu0 0.0
    %904 = vmatpush.msra.mxu0 0.0
    %905 = vmatpush.msra.mxu0 0.0
    %906 = vmatpush.msra.mxu0 0.0
    %907 = vmatpush.msra.mxu0 0.0
    %908 = vmatpush.msra.mxu0 %v811
    %909 = vmatmul.f32.gmra.mxu0 %v891
    %v910 = vpop.f32.mrf.mxu0
    %v911 = vadd.f32 0.0, %v910
    %912 = vdwg.mxu0
    %v914 = vsel %vm127, %v889, 0
    %916 = vmatpush.msra.mxu0 0.0
    %917 = vmatpush.msra.mxu0 0.0
    %918 = vmatpush.msra.mxu0 0.0
    %919 = vmatpush.msra.mxu0 0.0
    %920 = vmatpush.msra.mxu0 0.0
    %921 = vmatpush.msra.mxu0 0.0
    %922 = vmatpush.msra.mxu0 0.0
    %923 = vmatpush.msra.mxu0 0.0
    %924 = vmatpush.msra.mxu0 0.0
    %925 = vmatpush.msra.mxu0 0.0
    %926 = vmatpush.msra.mxu0 0.0
    %927 = vmatpush.msra.mxu0 0.0
    %928 = vmatpush.msra.mxu0 0.0
    %929 = vmatpush.msra.mxu0 0.0
    %930 = vmatpush.msra.mxu0 0.0
    %931 = vmatpush.msra.mxu0 %v814
    %932 = vmatmul.f32.gmra.mxu0 %v914
    %v933 = vpop.f32.mrf.mxu0
    %v934 = vadd.f32 0.0, %v933
    %935 = vdwg.mxu0
    %s936 = scalar_lea.vmem %s6, 24
    %v937 = vld [vmem:[%s936] sm:$0xff]
    %v939 = vsel %vm127, %v911, 0
    %v942 = vsel %vm127, %v934, 0
    %944 = vmatpush.msra.mxu0 0.0
    %945 = vmatpush.msra.mxu0 0.0
    %946 = vmatpush.msra.mxu0 0.0
    %947 = vmatpush.msra.mxu0 0.0
    %948 = vmatpush.msra.mxu0 0.0
    %949 = vmatpush.msra.mxu0 0.0
    %950 = vmatpush.msra.mxu0 0.0
    %951 = vmatpush.msra.mxu0 0.0
    %952 = vmatpush.msra.mxu0 0.0
    %953 = vmatpush.msra.mxu0 0.0
    %954 = vmatpush.msra.mxu0 0.0
    %955 = vmatpush.msra.mxu0 0.0
    %956 = vmatpush.msra.mxu0 0.0
    %957 = vmatpush.msra.mxu0 0.0
    %958 = vmatpush.msra.mxu0 0.0
    %959 = vmatpush.msra.mxu0 %v937
    %960 = vmatmul.f32.gmra.mxu0 %v939
    %v961 = vpop.f32.mrf.mxu0
    %v962 = vadd.f32 0.0, %v961
    %963 = vmatmul.f32.gmra.mxu0 %v942
    %v964 = vpop.f32.mrf.mxu0
    %v965 = vadd.f32 0.0, %v964
    %966 = vdwg.mxu0
    %v967 = vadd.f32 %v736, %v962
    %v968 = vadd.f32 %v737, %v965
    %vm969 = vcmask 261120
    %970 = vst.msk [vmem:[#allocation2] sm:$0xff] %vm969, %v967
    %971 = vst.msk [vmem:[#allocation2 + $0x8] sm:$0xff] %vm969, %v968
    // Predicated region
    $region30: #{tpu_custom_call.1} parent=1 // pred_check
      _
    $region31: #{tpu_custom_call.1} parent=1 // pred_check_branch
      %973 = sbr.rel (0) target = $region33
    $region32: #{tpu_custom_call.1} parent=1 // pred_region
      %975 = vsyncadd [#allocation3], 0
      %s976 = sshll.u32 [#allocation2], 4
      %s977 = int_to_ptr.vmem [resolvable:$true] %s976
      %s978 = sshll.u32 %s7, 4
      %s979 = int_to_ptr.hbm [resolvable:$true] %s978
      %984 = dma.vmem_to_hbm [thread:$0]  %s977, 256, %s979, [#allocation3], 128, 128, 8
    $region33: #{tpu_custom_call.1} parent=1 // pred_fallthru
      _
    // Predicated region
    $region34: #{tpu_custom_call.1} parent=1 // pred_check
      _
    $region35: #{tpu_custom_call.1} parent=1 // pred_check_branch
      %986 = sbr.rel (0) target = $region37
    $region36: #{tpu_custom_call.1} parent=1 // pred_region
      %988 = dma.done [#allocation3], 256
    $region37: #{tpu_custom_call.1} parent=1 // pred_fallthru
      _
    %989 = vsyncpa [#allocation3], 1

</llo_original>
